<compile_context>
chip_gen: v6e
topology: v6e:2x2x1
jax: 0.10.0
libtpu: 0.0.40
codegen_flags: <defaults>
</compile_context>

<pallas_src>
import functools

import jax
import jax.numpy as jnp
from jax.experimental import pallas as pl
from jax.experimental.pallas import tpu as pltpu


def _round_up(a: int, b: int) -> int:
    return (a + b - 1) // b * b


def _taylor_softmax_kernel(x_ref, o_ref, *, n: int, group: int):
    """fn = 1 + sum_{i=1..n} x^i / i! ; out = fn / sum_over_channel_group(fn).

    Block layout is (nb, g*group, lane_tile): the sublane axis holds g
    independent channel groups of size `group` (= C).  Each group gets its own
    reduce, so folding batches onto sublanes never mixes batches; lane columns
    are independent, so partial boundary tiles (lanes or leading rows) are
    safe -- garbage never contaminates valid elements.
    """
    gc = x_ref.shape[1]
    for j in range(gc // group):                    # static unroll, g is tiny
        lo, hi = j * group, (j + 1) * group
        # f32 math keeps us within 1e-5 of the reference; the kernel is
        # HBM-bandwidth bound, so the upcast cost is hidden.
        x = x_ref[:, lo:hi, :].astype(jnp.float32)
        fn = jnp.ones_like(x)
        denor = 1.0
        x_pow = jnp.ones_like(x)
        for i in range(1, n + 1):
            denor *= float(i)
            x_pow = x_pow * x                       # x**i built incrementally (VPU)
            fn = fn + x_pow * (1.0 / denor)
        s = jnp.sum(fn, axis=1, keepdims=True)      # reduce over channels (sublanes)
        # approx=False keeps the result within ~1 ulp of the divide-based ref.
        o_ref[:, lo:hi, :] = (fn * pl.reciprocal(s, approx=False)).astype(o_ref.dtype)


def _choose_tiles(n_rows: int, gc: int, L: int, itemsize: int, native_sub: int,
                  target_phys_bytes: int = 2 << 20):
    """Pick (nb, lane_tile) so one block is ~target bytes of PHYSICAL VMEM.

    Physical accounting: sublanes padded to `native_sub`, lanes padded to 128.
    With 2 MiB blocks, double-buffered in+out stays around 8 MiB.
    """
    padded_gc = _round_up(gc, native_sub)           # sublane padding is physical
    bytes_per_lane = padded_gc * itemsize
    max_tl = max(128, (target_phys_bytes // bytes_per_lane) // 128 * 128)
    tl = L if L <= max_tl else max_tl               # full-dim lane block is allowed

    # For small L, fold multiple leading (batch-group) rows per step so each
    # grid step moves a sizeable chunk rather than a few KiB.
    block_bytes = padded_gc * _round_up(tl, 128) * itemsize
    nb = int(max(1, min(n_rows, target_phys_bytes // max(1, block_bytes))))

    # Guarantee >= 2 grid blocks where possible so both v7x TensorCores get work.
    if pl.cdiv(n_rows, nb) * pl.cdiv(L, tl) < 2:
        if n_rows > 1:
            nb = pl.cdiv(n_rows, 2)                 # split along the leading axis
        elif tl >= 256:
            tl = _round_up(pl.cdiv(L, 2), 128)      # split along lanes (stay >=128)
    return nb, tl


def taylor_softmax_nchw(x: jax.Array, dim: int = 1, n: int = 2) -> jax.Array:
    """Matches TaylorSoftmax(dim=1, n=even).forward on NCHW input."""
    assert n % 2 == 0
    assert dim == 1, "this wrapper handles the default dim=1 (channel) case"
    N, C, H, W = x.shape
    L = H * W
    itemsize = jnp.dtype(x.dtype).itemsize
    native_sub = max(8, 32 // itemsize)             # 8 f32 / 16 bf16 / 32 int8

    # Fold g batch elements onto the sublane axis (free contiguous view) to
    # remove the C -> native_sub sublane padding.  Fall back to g=1 otherwise.
    g = 1
    if C < native_sub and native_sub % C == 0:
        for cand in range(native_sub // C, 0, -1):
            if N % cand == 0:
                g = cand
                break
    Np, GC = N // g, g * C
    x3 = x.reshape(Np, GC, L)                       # pure view, no data movement

    nb, tl = _choose_tiles(Np, GC, L, itemsize, native_sub)
    grid = (pl.cdiv(Np, nb), pl.cdiv(L, tl))        # boundary tiles are OK

    kernel = functools.partial(_taylor_softmax_kernel, n=n, group=C)
    out3 = pl.pallas_call(
        kernel,
        out_shape=jax.ShapeDtypeStruct((Np, GC, L), x.dtype),
        grid_spec=pltpu.PrefetchScalarGridSpec(
            num_scalar_prefetch=0,
            grid=grid,
            in_specs=[pl.BlockSpec((nb, GC, tl), lambda b, l: (b, 0, l))],
            out_specs=pl.BlockSpec((nb, GC, tl), lambda b, l: (b, 0, l)),
        ),
        compiler_params=pltpu.CompilerParams(
            # Both grid axes are independent: megacore / multi-TC friendly.
            dimension_semantics=("parallel", "parallel"),
        ),
    )(x3)
    return out3.reshape(N, C, H, W)                 # pure view back to NCHW


def _reference(x: jax.Array, dim: int = 1, n: int = 2) -> jax.Array:
    fn = jnp.ones_like(x)
    denor = 1.0
    for i in range(1, n + 1):
        denor *= i
        fn = fn + jnp.power(x, i) / denor
    return fn / jnp.sum(fn, axis=dim, keepdims=True)


if __name__ == "__main__":
    key = jax.random.PRNGKey(0)

    # Primary small NCHW example consistent with the module's usage.
    x = jax.random.normal(key, (2, 4, 16, 16), dtype=jnp.float32)
    out = jax.block_until_ready(taylor_softmax_nchw(x, dim=1, n=2))
    ref = _reference(x, dim=1, n=2)
    assert out.shape == x.shape
    assert jnp.allclose(out, ref, atol=1e-5, rtol=1e-5), "mismatch vs reference"

    # Higher (even) Taylor order on the same input.
    out4 = jax.block_until_ready(taylor_softmax_nchw(x, dim=1, n=4))
    assert jnp.allclose(out4, _reference(x, dim=1, n=4), atol=1e-5, rtol=1e-5), \
        "mismatch vs reference (n=4)"

    # Awkward spatial size (H*W not a multiple of 128): full-extent lane block.
    x2 = jax.random.normal(jax.random.PRNGKey(1), (2, 4, 7, 7), dtype=jnp.float32)
    out2 = jax.block_until_ready(taylor_softmax_nchw(x2, dim=1, n=2))
    assert jnp.allclose(out2, _reference(x2, dim=1, n=2), atol=1e-5, rtol=1e-5), \
        "mismatch vs reference (7x7)"

    # Odd batch: exercises the g=1 fallback (no sublane repack) and a partial
    # leading-dim boundary block.
    xb = jax.random.normal(jax.random.PRNGKey(2), (3, 4, 16, 16), dtype=jnp.float32)
    outb = jax.block_until_ready(taylor_softmax_nchw(xb, dim=1, n=2))
    assert jnp.allclose(outb, _reference(xb, dim=1, n=2), atol=1e-5, rtol=1e-5), \
        "mismatch vs reference (odd batch)"

    print("KERNEL_OK")
</pallas_src>

<mosaic_0001>
module attributes {stable_mosaic.version = 11 : i64} {
  func.func @_taylor_softmax_kernel(%arg0: i32, %arg1: i32, %arg2: memref<1x8x128xf32, #tpu.memory_space<vmem>>, %arg3: memref<1x8x128xf32, #tpu.memory_space<vmem>>) attributes {dimension_semantics = [#tpu.dimension_semantics<parallel>, #tpu.dimension_semantics<parallel>], iteration_bounds = array<i64: 1, 2>, scalar_prefetch = 0 : i64, scratch_operands = 0 : i64, tpu.core_type = #tpu.core_type<tc>, window_params = [{transform_indices = @transform_0, window_bounds = array<i64: 1, 8, 128>}, {transform_indices = @transform_1, window_bounds = array<i64: 1, 8, 128>}]} {
    %c0 = arith.constant 0 : index
    %c0_0 = arith.constant 0 : index
    %c0_1 = arith.constant 0 : index
    %0 = vector.load %arg2[%c0, %c0_0, %c0_1] : memref<1x8x128xf32, #tpu.memory_space<vmem>>, vector<1x4x128xf32>
    %cst = arith.constant 1.000000e+00 : f32
    %1 = vector.broadcast %cst : f32 to vector<1x4x128xf32>
    %cst_2 = arith.constant 1.000000e+00 : f32
    %2 = vector.broadcast %cst_2 : f32 to vector<1x4x128xf32>
    %3 = arith.mulf %2, %0 : vector<1x4x128xf32>
    %cst_3 = arith.constant 1.000000e+00 : f32
    %4 = vector.broadcast %cst_3 : f32 to vector<1x4x128xf32>
    %5 = arith.mulf %3, %4 : vector<1x4x128xf32>
    %6 = arith.addf %1, %5 : vector<1x4x128xf32>
    %7 = arith.mulf %3, %0 : vector<1x4x128xf32>
    %cst_4 = arith.constant 5.000000e-01 : f32
    %8 = vector.broadcast %cst_4 : f32 to vector<1x4x128xf32>
    %9 = arith.mulf %7, %8 : vector<1x4x128xf32>
    %10 = arith.addf %6, %9 : vector<1x4x128xf32>
    %cst_5 = arith.constant dense<0.000000e+00> : vector<1x128xf32>
    %11 = vector.multi_reduction <add>, %10, %cst_5 [1] : vector<1x4x128xf32> to vector<1x128xf32>
    %12 = vector.shape_cast %11 : vector<1x128xf32> to vector<1x1x128xf32>
    %13 = tpu.reciprocal %12 : vector<1x1x128xf32> -> vector<1x1x128xf32>
    %14 = vector.broadcast %13 : vector<1x1x128xf32> to vector<1x4x128xf32>
    %15 = arith.mulf %10, %14 : vector<1x4x128xf32>
    %c0_6 = arith.constant 0 : index
    %c0_7 = arith.constant 0 : index
    %c0_8 = arith.constant 0 : index
    %16 = vector.load %arg3[%c0_6, %c0_7, %c0_8] : memref<1x8x128xf32, #tpu.memory_space<vmem>>, vector<1x4x128xf32>
    tpu.vector_store %arg3[%c0_6, %c0_7, %c0_8], %15 {strides = array<i32>} : memref<1x8x128xf32, #tpu.memory_space<vmem>>, vector<1x4x128xf32>,
    %c0_9 = arith.constant 0 : index
    %c4 = arith.constant 4 : index
    %c0_10 = arith.constant 0 : index
    %17 = vector.load %arg2[%c0_9, %c4, %c0_10] : memref<1x8x128xf32, #tpu.memory_space<vmem>>, vector<1x4x128xf32>
    %cst_11 = arith.constant 1.000000e+00 : f32
    %18 = vector.broadcast %cst_11 : f32 to vector<1x4x128xf32>
    %cst_12 = arith.constant 1.000000e+00 : f32
    %19 = vector.broadcast %cst_12 : f32 to vector<1x4x128xf32>
    %20 = arith.mulf %19, %17 : vector<1x4x128xf32>
    %cst_13 = arith.constant 1.000000e+00 : f32
    %21 = vector.broadcast %cst_13 : f32 to vector<1x4x128xf32>
    %22 = arith.mulf %20, %21 : vector<1x4x128xf32>
    %23 = arith.addf %18, %22 : vector<1x4x128xf32>
    %24 = arith.mulf %20, %17 : vector<1x4x128xf32>
    %cst_14 = arith.constant 5.000000e-01 : f32
    %25 = vector.broadcast %cst_14 : f32 to vector<1x4x128xf32>
    %26 = arith.mulf %24, %25 : vector<1x4x128xf32>
    %27 = arith.addf %23, %26 : vector<1x4x128xf32>
    %cst_15 = arith.constant dense<0.000000e+00> : vector<1x128xf32>
    %28 = vector.multi_reduction <add>, %27, %cst_15 [1] : vector<1x4x128xf32> to vector<1x128xf32>
    %29 = vector.shape_cast %28 : vector<1x128xf32> to vector<1x1x128xf32>
    %30 = tpu.reciprocal %29 : vector<1x1x128xf32> -> vector<1x1x128xf32>
    %31 = vector.broadcast %30 : vector<1x1x128xf32> to vector<1x4x128xf32>
    %32 = arith.mulf %27, %31 : vector<1x4x128xf32>
    %c0_16 = arith.constant 0 : index
    %c4_17 = arith.constant 4 : index
    %c0_18 = arith.constant 0 : index
    %33 = vector.load %arg3[%c0_16, %c4_17, %c0_18] : memref<1x8x128xf32, #tpu.memory_space<vmem>>, vector<1x4x128xf32>
    tpu.vector_store %arg3[%c0_16, %c4_17, %c0_18], %32 {strides = array<i32>} : memref<1x8x128xf32, #tpu.memory_space<vmem>>, vector<1x4x128xf32>,
    return
  }
  func.func @transform_0(%arg0: i32, %arg1: i32) -> (i32, i32, i32) {
    %c0_i32 = arith.constant 0 : i32
    %c0_i32_0 = arith.constant 0 : i32
    return %arg0, %c0_i32, %arg1 : i32, i32, i32
  }
  func.func @transform_1(%arg0: i32, %arg1: i32) -> (i32, i32, i32) {
    %c0_i32 = arith.constant 0 : i32
    %c0_i32_0 = arith.constant 0 : i32
    return %arg0, %c0_i32, %arg1 : i32, i32, i32
  }
}

</mosaic_0001>

<llo_original>
// kernel: tpu_custom_call.1
$region0: #{tpu_custom_call.1}
  #allocation0 [shape = 'u32[]', space=smem, size = 0x4, offset = 0x4, fixed_abs, tag = 'smem constant byte address 0x4 - core index']
  #allocation1 [shape = 'u32[144,128]{1,0:T(1,128)}', space=vmem, size = 0x12000, scoped, tag = 'internal scratch']
  %s0 = inlined_call_operand.hbm [shape: f32[1,8,256], index: 0, kind: input, shape index: {}]
  %s1 = inlined_call_operand.hbm [shape: f32[1,8,256], index: 1, kind: output, shape index: {}]
  %s2 = sld [smem:[#allocation0]]
  $region41: #{tpu_custom_call.1} parent=0
    _
  %s4 = ssub.s32 1, %s2
  %s5 = scalar_select 0, %s4, %s2
  $region1: #{tpu_custom_call.1} parent=0
    #allocation2 [shape = 'u8[8192]{0}', space=vmem, size = 0x2000, scoped, tag = 'input window, operand 0']
    #allocation3 [shape = 's32[2]{0}', space=sflag, size = 0x8, scoped, tag = 'scoped memory for tpu_custom_call.1']
    #allocation4 [shape = 's32[2]{0}', space=sflag, size = 0x8, scoped, tag = 'scoped memory for tpu_custom_call.1']
    #allocation5 [shape = 'u8[8192]{0}', space=vmem, size = 0x2000, scoped, tag = 'output window, operand 0']
    %6 = vsyncpa [#allocation3], 0
    %s7 = scalar_lea.sflag [#allocation3], 1
    %8 = vsyncpa %s7, 0
    %9 = vsyncpa [#allocation4], 0
    %s10 = scalar_lea.sflag [#allocation4], 1
    %11 = vsyncpa %s10, 0
    loop: start=0, step=1, limit=4
    $region2: #{tpu_custom_call.1} parent=1 // loop_pre_header
      _
    $region3: #{tpu_custom_call.1} parent=1 // loop_header
      %s13 = sphi 0, %s17
      %p14 = scmp.ge.s32.totalorder %s13, 4
      %s20 = sphi 0, %s32
      %s21 = sphi 0, %s28
      %s22 = sphi 0, %s20
      %s23 = sphi 0, %s21
      %s24 = sphi 0, %s22
      %s25 = sphi 0, %s23
      %s37 = sphi 0, %s39
      %s40 = sphi 0, %s37
      %s41 = sphi 0, %s40
      %s57 = sphi 0, %s41
      %s65 = sphi 0, %s67
      %s68 = sphi 0, %s65
      %s69 = sphi 0, %s68
      %s85 = sphi 0, %s69
    $region4: #{tpu_custom_call.1} parent=1 // loop_header_branch
      %16 = sbr.rel (%p14) target = $region8
    $region5: #{tpu_custom_call.1} parent=1 // loop_body
      %s18 = ssub.s32 %s13, 1
      %s19 = ssub.s32 %s13, 2
      %s26 = sadd.s32 1, %s21
      %p27 = scmp.ge.s32.totalorder %s26, 2
      %s28 = scalar_select %p27, 0, %s26
      %s29 = sadd.s32 1, %s20
      %s30 = scalar_select %p27, %s29, %s20
      %p31 = scmp.ge.s32.totalorder %s30, 1
      %s32 = scalar_select %p31, 0, %s30
      %s33 = ssub.s32 %s20, %s32
      %s34 = ssub.s32 %s21, %s28
      %s35 = sor.u32 %s33, %s34
      %p36 = scmp.eq.s32.totalorder %s35, 0
      %s38 = sadd.s32 %s37, 1
      %s39 = scalar_select %p36, %s37, %s38
      %p42 = pneg %p36
      %p43 = scmp.eq.s32.totalorder %s13, 1
      %p44 = por %p42, %p43
      %p45 = scmp.ne.s32.totalorder %s37, %s40
      %p46 = scmp.eq.s32.totalorder %s13, 0
      %p47 = por %p45, %p46
      %p48 = scmp.ne.s32.totalorder %s37, %s40
      %p49 = scmp.eq.s32.totalorder %s18, 1
      %p50 = por %p48, %p49
      %p51 = scmp.ne.s32.totalorder %s40, %s41
      %p52 = scmp.eq.s32.totalorder %s18, 0
      %p53 = por %p51, %p52
      %p54 = scmp.ne.s32.totalorder %s40, %s41
      %p55 = scmp.eq.s32.totalorder %s19, 1
      %p56 = por %p54, %p55
      %p58 = scmp.ne.s32.totalorder %s41, %s57
      %p59 = scmp.eq.s32.totalorder %s19, 0
      %p60 = por %p58, %p59
      %s61 = ssub.s32 %s20, %s32
      %s62 = ssub.s32 %s21, %s28
      %s63 = sor.u32 %s61, %s62
      %p64 = scmp.eq.s32.totalorder %s63, 0
      %s66 = sadd.s32 %s65, 1
      %s67 = scalar_select %p64, %s65, %s66
      %p70 = pneg %p64
      %p71 = scmp.eq.s32.totalorder %s13, 1
      %p72 = por %p70, %p71
      %p73 = scmp.ne.s32.totalorder %s65, %s68
      %p74 = scmp.eq.s32.totalorder %s13, 0
      %p75 = por %p73, %p74
      %p76 = scmp.ne.s32.totalorder %s65, %s68
      %p77 = scmp.eq.s32.totalorder %s18, 1
      %p78 = por %p76, %p77
      %p79 = scmp.ne.s32.totalorder %s68, %s69
      %p80 = scmp.eq.s32.totalorder %s18, 0
      %p81 = por %p79, %p80
      %p82 = scmp.ne.s32.totalorder %s68, %s69
      %p83 = scmp.eq.s32.totalorder %s19, 1
      %p84 = por %p82, %p83
      %p86 = scmp.ne.s32.totalorder %s69, %s85
      %p87 = scmp.eq.s32.totalorder %s19, 0
      %p88 = por %p86, %p87
      %p89 = scmp.le.s32.totalorder 1, %s13
      %p90 = scmp.lt.s32.totalorder %s13, 3
      %p91 = pnand %p89, %p90
      %p92 = pneg %p91
      // Predicated region
      $region9: #{tpu_custom_call.1} parent=5 // pred_check
        _
      $region10: #{tpu_custom_call.1} parent=5 // pred_check_branch
        %94 = sbr.rel (%p91) target = $region12
      $region11: #{tpu_custom_call.1} parent=5 // pred_region
        %s95 = ssub.s32 %s13, 1
      $region12: #{tpu_custom_call.1} parent=5 // pred_fallthru
        _
      %p96 = scmp.lt.s32.totalorder %s13, 2
      // Predicated region
      $region13: #{tpu_custom_call.1} parent=5 // pred_check
        %p97 = pneg %p96
      $region14: #{tpu_custom_call.1} parent=5 // pred_check_branch
        %99 = sbr.rel (%p97) target = $region16
      $region15: #{tpu_custom_call.1} parent=5 // pred_region
        // Predicated region
        $region17: #{tpu_custom_call.1} parent=15 // pred_check
          %p100 = pneg %p47
        $region18: #{tpu_custom_call.1} parent=15 // pred_check_branch
          %102 = sbr.rel (%p100) target = $region20
        $region19: #{tpu_custom_call.1} parent=15 // pred_region
          %s103 = sand.u32 %s37, 1
          %s104 = scalar_lea.sflag [#allocation3], %s103
          %s105 = sand.u32 %s37, 1
          %s106 = smul.addr %s105, 8
          %s107 = scalar_lea.vmem [#allocation2], %s106
          %s109 = ssub.s32 128, 128
          %110 = vsyncadd %s104, %s109
          %s111 = smul.addr %s20, 2
          %s112 = sadd.s32 %s21, %s111
          %s113 = smul.addr %s112, 128
          %s114 = scalar_lea.hbm %s0, %s113
          %s116 = sshll.u32 %s107, 4
          %s117 = int_to_ptr.vmem [resolvable:$true] %s116
          %119 = dma.hbm_to_vmem [thread:$0]  %s114, 128, %s117, %s104
        $region20: #{tpu_custom_call.1} parent=15 // pred_fallthru
          _
      $region16: #{tpu_custom_call.1} parent=5 // pred_fallthru
        _
      %p120 = scmp.le.s32.totalorder 1, %s13
      %p121 = scmp.lt.s32.totalorder %s13, 3
      %p122 = pnand %p120, %p121
      %p123 = pneg %p122
      // Predicated region
      $region21: #{tpu_custom_call.1} parent=5 // pred_check
        _
      $region22: #{tpu_custom_call.1} parent=5 // pred_check_branch
        %125 = sbr.rel (%p122) target = $region24
      $region23: #{tpu_custom_call.1} parent=5 // pred_region
        %s126 = ssub.s32 %s13, 1
        %s127 = sand.u32 %s40, 1
        %s128 = scalar_lea.sflag [#allocation3], %s127
        %s129 = sand.u32 %s40, 1
        %s130 = smul.addr %s129, 8
        %s131 = scalar_lea.vmem [#allocation2], %s130
        // Predicated region
        $region25: #{tpu_custom_call.1} parent=23 // pred_check
          %p132 = pneg %p53
        $region26: #{tpu_custom_call.1} parent=23 // pred_check_branch
          %134 = sbr.rel (%p132) target = $region28
        $region27: #{tpu_custom_call.1} parent=23 // pred_region
          %135 = dma.done %s128, 128
        $region28: #{tpu_custom_call.1} parent=23 // pred_fallthru
          _
        %s136 = sand.u32 %s40, 1
        %s137 = scalar_lea.sflag [#allocation3], %s136
        %s138 = sand.u32 %s40, 1
        %s139 = smul.addr %s138, 8
        %s140 = scalar_lea.vmem [#allocation2], %s139
        %p141 = pneg %p53
        %p142 = pneg %p50
        %p143 = pneg %p81
        %p144 = pneg %p78
        %s145 = sand.u32 %s68, 1
        %s146 = scalar_lea.sflag [#allocation4], %s145
        %s147 = sand.u32 %s68, 1
        %s148 = smul.addr %s147, 8
        %s149 = scalar_lea.vmem [#allocation5], %s148
        %v150 = vld [vmem:[%s131] sm:$0xf]
        %v151 = vadd.f32 %v150, 1.0
        %v152 = vmul.f32 %v150, %v150
        %v153 = vmul.f32 %v152, 0.5
        %v154 = vadd.f32 %v151, %v153
        %vm155 = vcmask 1043456
        %v156 = vsel %vm155, %v154, 0.0
        %v157 = vrot.slane %v156, 4
        %v158 = vadd.f32 %v156, %v157
        %v159 = vrot.slane %v158, 2
        %v160 = vadd.f32 %v158, %v159
        %v161 = vrot.slane %v160, 1
        %v162 = vadd.f32 %v160, %v161
        %v163 = vrcp.pop %v162
        %v164 = vmul.f32 %v154, %v163
        %165 = vst [vmem:[%s149] sm:$0xf] %v164
        %v166 = vld [vmem:[%s131 + $0x4] sm:$0xf]
        %v167 = vadd.f32 %v166, 1.0
        %v168 = vmul.f32 %v166, %v166
        %v169 = vmul.f32 %v168, 0.5
        %v170 = vadd.f32 %v167, %v169
        %v171 = vsel %vm155, %v170, 0.0
        %v172 = vrot.slane %v171, 4
        %v173 = vadd.f32 %v171, %v172
        %v174 = vrot.slane %v173, 2
        %v175 = vadd.f32 %v173, %v174
        %v176 = vrot.slane %v175, 1
        %v177 = vadd.f32 %v175, %v176
        %v178 = vrcp.pop %v177
        %v179 = vmul.f32 %v170, %v178
        %180 = vst [vmem:[%s149 + $0x4] sm:$0xf] %v179
        %s181 = sand.u32 %s68, 1
        %s182 = scalar_lea.sflag [#allocation4], %s181
        %s183 = sand.u32 %s68, 1
        %s184 = smul.addr %s183, 8
        %s185 = scalar_lea.vmem [#allocation5], %s184
        // Predicated region
        $region29: #{tpu_custom_call.1} parent=23 // pred_check
          %p186 = pneg %p78
        $region30: #{tpu_custom_call.1} parent=23 // pred_check_branch
          %188 = sbr.rel (%p186) target = $region32
        $region31: #{tpu_custom_call.1} parent=23 // pred_region
          %s190 = ssub.s32 128, 128
          %191 = vsyncadd %s182, %s190
          %s192 = smul.addr %s22, 2
          %s193 = sadd.s32 %s23, %s192
          %s194 = smul.addr %s193, 128
          %s195 = scalar_lea.hbm %s1, %s194
          %s197 = sshll.u32 %s185, 4
          %s198 = int_to_ptr.vmem [resolvable:$true] %s197
          %200 = dma.vmem_to_hbm [thread:$0]  %s198, 128, %s195, %s182
        $region32: #{tpu_custom_call.1} parent=23 // pred_fallthru
          _
      $region24: #{tpu_custom_call.1} parent=5 // pred_fallthru
        _
      %p201 = scmp.le.s32.totalorder 2, %s13
      // Predicated region
      $region33: #{tpu_custom_call.1} parent=5 // pred_check
        %p202 = pneg %p201
      $region34: #{tpu_custom_call.1} parent=5 // pred_check_branch
        %204 = sbr.rel (%p202) target = $region36
      $region35: #{tpu_custom_call.1} parent=5 // pred_region
        %s205 = ssub.s32 %s13, 2
        // Predicated region
        $region37: #{tpu_custom_call.1} parent=35 // pred_check
          %p206 = pneg %p84
        $region38: #{tpu_custom_call.1} parent=35 // pred_check_branch
          %208 = sbr.rel (%p206) target = $region40
        $region39: #{tpu_custom_call.1} parent=35 // pred_region
          %s209 = sand.u32 %s69, 1
          %s210 = scalar_lea.sflag [#allocation4], %s209
          %s211 = sand.u32 %s69, 1
          %s212 = smul.addr %s211, 8
          %s213 = scalar_lea.vmem [#allocation5], %s212
          %214 = dma.done %s210, 128
        $region40: #{tpu_custom_call.1} parent=35 // pred_fallthru
          _
      $region36: #{tpu_custom_call.1} parent=5 // pred_fallthru
        _
    $region6: #{tpu_custom_call.1} parent=1 // loop_footer
      %s17 = sadd.s32 1, %s13
    $region7: #{tpu_custom_call.1} parent=1 // loop_footer_branch
      %12 = sbr.rel target = $region3
    $region8: #{tpu_custom_call.1} parent=1 // loop_exit
      _
    %215 = vsyncpa [#allocation3], 1
    %s216 = scalar_lea.sflag [#allocation3], 1
    %217 = vsyncpa %s216, 1
    %218 = vsyncpa [#allocation4], 1
    %s219 = scalar_lea.sflag [#allocation4], 1
    %220 = vsyncpa %s219, 1

</llo_original>
